<compile_context>
chip_gen: v5e
topology: v5e:2x2
jax: 0.10.0
libtpu: 0.0.40
codegen_flags: <defaults>
</compile_context>

<pallas_src>
import math

import jax
import jax.numpy as jnp
from jax.experimental import pallas as pl
from jax.experimental.pallas import tpu as pltpu


def sac_critic_kernel(x_ref, w1_ref, b1_ref, w2_ref, b2_ref, w3_ref, b3_ref,
                      o_ref):
    # Layer 1: bf16 MXU matmul with f32 accumulation; bias + ReLU in f32 (VPU).
    h = jnp.dot(x_ref[...], w1_ref[...], preferred_element_type=jnp.float32)
    h = jnp.maximum(h + b1_ref[...], 0.0)

    # Layer 2: same pattern (re-cast the f32 activations to bf16 for the MXU).
    h = jnp.dot(h.astype(jnp.bfloat16), w2_ref[...],
                preferred_element_type=jnp.float32)
    h = jnp.maximum(h + b2_ref[...], 0.0)

    # Layer 3: single output column -> VPU multiply + lane reduce (XLU), not a
    # pathologically shaped N=1 MXU matmul.  Scalar bias comes from SMEM.
    q = jnp.sum(h * w3_ref[...], axis=-1, keepdims=True) + b3_ref[0, 0]
    o_ref[...] = q.astype(o_ref.dtype)


def _round_up(x, m):
    return ((x + m - 1) // m) * m


def _resident_spec(shape):
    # Weights/biases never change across the batch grid: constant index_map
    # keeps them VMEM-resident; Buffered(1) skips the useless second buffer.
    return pl.BlockSpec(shape, lambda i: (0, 0), pipeline_mode=pl.Buffered(1))


def sac_critic_forward(state, action, params, *, block_b=None):
    w1, b1, w2, b2, w3, b3 = params
    batch, state_dim = state.shape
    action_dim = action.shape[1]
    in_dim = state_dim + action_dim
    hidden = w1.shape[1]
    assert w1.shape[0] == in_dim and w2.shape == (hidden, hidden)

    # One tiny wrapper-side concat + bf16 casts.  All dots accumulate in f32.
    x = jnp.concatenate([state, action], axis=1).astype(jnp.bfloat16)
    w1b = w1.astype(jnp.bfloat16)
    w2b = w2.astype(jnp.bfloat16)
    b1f = b1.reshape(1, hidden).astype(jnp.float32)
    b2f = b2.reshape(1, hidden).astype(jnp.float32)
    w3_row = w3.reshape(1, hidden).astype(jnp.float32)     # VPU side: keep f32
    b3_smem = jnp.asarray(b3, jnp.float32).reshape(1, 1)   # scalar bias (SMEM)

    # Batch tile: full batch when small; otherwise >=2 grid steps (v7x 2-TC
    # split) with tiles up to 4096 rows to amortize per-step overhead while
    # staying far inside the 32 MiB scoped-VMEM limit.
    if block_b is None:
        if batch <= 512:
            block_b = batch
        else:
            block_b = min(4096, _round_up(pl.cdiv(batch, 2), 16))
    grid = (pl.cdiv(batch, block_b),)

    flops = 2 * batch * (in_dim * hidden + hidden * hidden + hidden)
    bytes_accessed = (
        2 * batch * in_dim                          # bf16 [state|action] in
        + 2 * (in_dim * hidden + hidden * hidden)   # bf16 w1, w2
        + 4 * (3 * hidden + 1)                      # f32 b1, b2, w3_row, b3
        + 4 * batch                                 # f32 q out
    )

    return pl.pallas_call(
        sac_critic_kernel,
        out_shape=jax.ShapeDtypeStruct((batch, 1), jnp.float32),
        grid=grid,
        in_specs=[
            pl.BlockSpec((block_b, in_dim), lambda i: (i, 0)),
            _resident_spec((in_dim, hidden)),
            _resident_spec((1, hidden)),
            _resident_spec((hidden, hidden)),
            _resident_spec((1, hidden)),
            _resident_spec((1, hidden)),
            pl.BlockSpec(memory_space=pltpu.MemorySpace.SMEM),   # b3 scalar
        ],
        out_specs=pl.BlockSpec((block_b, 1), lambda i: (i, 0)),
        compiler_params=pltpu.CompilerParams(
            dimension_semantics=("parallel",),
            vmem_limit_bytes=32 * 1024 * 1024,
        ),
        cost_estimate=pl.CostEstimate(
            flops=flops, transcendentals=0, bytes_accessed=bytes_accessed),
    )(x, w1b, b1f, w2b, b2f, w3_row, b3_smem)


def init_linear(key, in_dim, out_dim):
    # Mimic torch.nn.Linear default init: U(-1/sqrt(in), 1/sqrt(in)).
    k_w, k_b = jax.random.split(key)
    bound = 1.0 / math.sqrt(in_dim)
    w = jax.random.uniform(k_w, (in_dim, out_dim), jnp.float32, -bound, bound)
    b = jax.random.uniform(k_b, (1, out_dim), jnp.float32, -bound, bound)
    return w, b


def init_sac_critic_params(key, state_dim, action_dim, hidden_size):
    k1, k2, k3 = jax.random.split(key, 3)
    w1, b1 = init_linear(k1, state_dim + action_dim, hidden_size)
    w2, b2 = init_linear(k2, hidden_size, hidden_size)
    w3, b3 = init_linear(k3, hidden_size, 1)
    return (w1, b1, w2, b2, w3, b3)


if __name__ == "__main__":
    state_dim, action_dim, hidden_size = 16, 8, 32
    batch = 8

    key = jax.random.PRNGKey(0)
    k_params, k_state, k_action = jax.random.split(key, 3)

    params = init_sac_critic_params(k_params, state_dim, action_dim, hidden_size)
    state = jax.random.normal(k_state, (batch, state_dim), jnp.float32)
    action = jax.random.normal(k_action, (batch, action_dim), jnp.float32)

    q = sac_critic_forward(state, action, params)
    q = jax.block_until_ready(q)

    (w1, b1, w2, b2, w3, b3) = params
    x = jnp.concatenate([state, action], axis=1)

    # Full-f32 reference (exact original module semantics).
    ref32 = jnp.maximum(x @ w1 + b1, 0.0)
    ref32 = jnp.maximum(ref32 @ w2 + b2, 0.0)
    ref32 = ref32 @ w3 + b3

    # Mixed-precision reference matching the kernel's bf16-MXU / f32-accumulate
    # strategy (tight check on the kernel's actual numerics).
    hb = jnp.dot(x.astype(jnp.bfloat16), w1.astype(jnp.bfloat16),
                 preferred_element_type=jnp.float32)
    hb = jnp.maximum(hb + b1, 0.0)
    hb = jnp.dot(hb.astype(jnp.bfloat16), w2.astype(jnp.bfloat16),
                 preferred_element_type=jnp.float32)
    hb = jnp.maximum(hb + b2, 0.0)
    ref_mp = jnp.sum(hb * w3.reshape(1, -1), axis=-1, keepdims=True) + b3.reshape(1, 1)

    assert q.shape == (batch, 1) and q.dtype == jnp.float32
    assert jnp.allclose(q, ref_mp, atol=2e-3, rtol=2e-3), \
        float(jnp.max(jnp.abs(q - ref_mp)))
    assert jnp.allclose(q, ref32, atol=1e-1, rtol=1e-1), \
        float(jnp.max(jnp.abs(q - ref32)))

    print("KERNEL_OK")
</pallas_src>

<mosaic_0001>
module attributes {stable_mosaic.version = 11 : i64} {
  func.func @sac_critic_kernel(%arg0: i32, %arg1: memref<8x24xbf16, #tpu.memory_space<vmem>>, %arg2: memref<24x32xbf16, #tpu.memory_space<vmem>>, %arg3: memref<1x32xf32, #tpu.memory_space<vmem>>, %arg4: memref<32x32xbf16, #tpu.memory_space<vmem>>, %arg5: memref<1x32xf32, #tpu.memory_space<vmem>>, %arg6: memref<1x32xf32, #tpu.memory_space<vmem>>, %arg7: memref<1x1xf32, #tpu.memory_space<smem>>, %arg8: memref<8x1xf32, #tpu.memory_space<vmem>>) attributes {dimension_semantics = [#tpu.dimension_semantics<parallel>], iteration_bounds = array<i64: 1>, scalar_prefetch = 0 : i64, scratch_operands = 0 : i64, tpu.core_type = #tpu.core_type<tc>, window_params = [{transform_indices = @transform_0, window_bounds = array<i64: 8, 24>}, {pipeline_mode = #tpu.pipeline_mode<synchronous>, transform_indices = @transform_1, window_bounds = array<i64: 24, 32>}, {pipeline_mode = #tpu.pipeline_mode<synchronous>, transform_indices = @transform_2, window_bounds = array<i64: 1, 32>}, {pipeline_mode = #tpu.pipeline_mode<synchronous>, transform_indices = @transform_3, window_bounds = array<i64: 32, 32>}, {pipeline_mode = #tpu.pipeline_mode<synchronous>, transform_indices = @transform_4, window_bounds = array<i64: 1, 32>}, {pipeline_mode = #tpu.pipeline_mode<synchronous>, transform_indices = @transform_5, window_bounds = array<i64: 1, 32>}, {transform_indices = @transform_6, window_bounds = array<i64: 1, 1>}, {transform_indices = @transform_7, window_bounds = array<i64: 8, 1>}]} {
    %c0 = arith.constant 0 : index
    %c0_0 = arith.constant 0 : index
    %0 = vector.load %arg1[%c0, %c0_0] : memref<8x24xbf16, #tpu.memory_space<vmem>>, vector<8x24xbf16>
    %c0_1 = arith.constant 0 : index
    %c0_2 = arith.constant 0 : index
    %1 = vector.load %arg2[%c0_1, %c0_2] : memref<24x32xbf16, #tpu.memory_space<vmem>>, vector<24x32xbf16>
    %cst = arith.constant dense<0.000000e+00> : vector<8x32xf32>
    %2 = tpu.matmul %0, %1, %cst {dimension_numbers = #tpu.dot_dimension_numbers<[1], [0], [0], [1], [0, 0, 1, 1], [], []>} : vector<8x24xbf16>, vector<24x32xbf16>, vector<8x32xf32> -> vector<8x32xf32>
    %c0_3 = arith.constant 0 : index
    %c0_4 = arith.constant 0 : index
    %3 = vector.load %arg3[%c0_3, %c0_4] : memref<1x32xf32, #tpu.memory_space<vmem>>, vector<1x32xf32>
    %4 = vector.broadcast %3 : vector<1x32xf32> to vector<8x32xf32>
    %5 = arith.addf %2, %4 : vector<8x32xf32>
    %cst_5 = arith.constant 0.000000e+00 : f32
    %6 = vector.broadcast %cst_5 : f32 to vector<8x32xf32>
    %7 = arith.maximumf %5, %6 : vector<8x32xf32>
    %8 = arith.truncf %7 : vector<8x32xf32> to vector<8x32xbf16>
    %c0_6 = arith.constant 0 : index
    %c0_7 = arith.constant 0 : index
    %9 = vector.load %arg4[%c0_6, %c0_7] : memref<32x32xbf16, #tpu.memory_space<vmem>>, vector<32x32xbf16>
    %cst_8 = arith.constant dense<0.000000e+00> : vector<8x32xf32>
    %10 = tpu.matmul %8, %9, %cst_8 {dimension_numbers = #tpu.dot_dimension_numbers<[1], [0], [0], [1], [0, 0, 1, 1], [], []>} : vector<8x32xbf16>, vector<32x32xbf16>, vector<8x32xf32> -> vector<8x32xf32>
    %c0_9 = arith.constant 0 : index
    %c0_10 = arith.constant 0 : index
    %11 = vector.load %arg5[%c0_9, %c0_10] : memref<1x32xf32, #tpu.memory_space<vmem>>, vector<1x32xf32>
    %12 = vector.broadcast %11 : vector<1x32xf32> to vector<8x32xf32>
    %13 = arith.addf %10, %12 : vector<8x32xf32>
    %cst_11 = arith.constant 0.000000e+00 : f32
    %14 = vector.broadcast %cst_11 : f32 to vector<8x32xf32>
    %15 = arith.maximumf %13, %14 : vector<8x32xf32>
    %c0_12 = arith.constant 0 : index
    %c0_13 = arith.constant 0 : index
    %16 = vector.load %arg6[%c0_12, %c0_13] : memref<1x32xf32, #tpu.memory_space<vmem>>, vector<1x32xf32>
    %17 = vector.broadcast %16 : vector<1x32xf32> to vector<8x32xf32>
    %18 = arith.mulf %15, %17 : vector<8x32xf32>
    %cst_14 = arith.constant dense<0.000000e+00> : vector<8xf32>
    %19 = vector.multi_reduction <add>, %18, %cst_14 [1] : vector<8x32xf32> to vector<8xf32>
    %20 = vector.shape_cast %19 : vector<8xf32> to vector<8x1xf32>
    %c0_15 = arith.constant 0 : index
    %c0_16 = arith.constant 0 : index
    %21 = memref.load %arg7[%c0_15, %c0_16] : memref<1x1xf32, #tpu.memory_space<smem>>
    %22 = vector.broadcast %21 : f32 to vector<8x1xf32>
    %23 = arith.addf %20, %22 : vector<8x1xf32>
    %c0_17 = arith.constant 0 : index
    %c0_18 = arith.constant 0 : index
    %24 = vector.load %arg8[%c0_17, %c0_18] : memref<8x1xf32, #tpu.memory_space<vmem>>, vector<8x1xf32>
    tpu.vector_store %arg8[%c0_17, %c0_18], %23 {strides = array<i32>} : memref<8x1xf32, #tpu.memory_space<vmem>>, vector<8x1xf32>,
    return
  }
  func.func @transform_0(%arg0: i32) -> (i32, i32) {
    %c0_i32 = arith.constant 0 : i32
    %c0_i32_0 = arith.constant 0 : i32
    return %arg0, %c0_i32 : i32, i32
  }
  func.func @transform_1(%arg0: i32) -> (i32, i32) {
    %c0_i32 = arith.constant 0 : i32
    %c0_i32_0 = arith.constant 0 : i32
    %c0_i32_1 = arith.constant 0 : i32
    return %c0_i32, %c0_i32_0 : i32, i32
  }
  func.func @transform_2(%arg0: i32) -> (i32, i32) {
    %c0_i32 = arith.constant 0 : i32
    %c0_i32_0 = arith.constant 0 : i32
    %c0_i32_1 = arith.constant 0 : i32
    return %c0_i32, %c0_i32_0 : i32, i32
  }
  func.func @transform_3(%arg0: i32) -> (i32, i32) {
    %c0_i32 = arith.constant 0 : i32
    %c0_i32_0 = arith.constant 0 : i32
    %c0_i32_1 = arith.constant 0 : i32
    return %c0_i32, %c0_i32_0 : i32, i32
  }
  func.func @transform_4(%arg0: i32) -> (i32, i32) {
    %c0_i32 = arith.constant 0 : i32
    %c0_i32_0 = arith.constant 0 : i32
    %c0_i32_1 = arith.constant 0 : i32
    return %c0_i32, %c0_i32_0 : i32, i32
  }
  func.func @transform_5(%arg0: i32) -> (i32, i32) {
    %c0_i32 = arith.constant 0 : i32
    %c0_i32_0 = arith.constant 0 : i32
    %c0_i32_1 = arith.constant 0 : i32
    return %c0_i32, %c0_i32_0 : i32, i32
  }
  func.func @transform_6(%arg0: i32) -> (i32, i32) {
    %c0_i32 = arith.constant 0 : i32
    %c0_i32_0 = arith.constant 0 : i32
    %c0_i32_1 = arith.constant 0 : i32
    return %c0_i32, %c0_i32_0 : i32, i32
  }
  func.func @transform_7(%arg0: i32) -> (i32, i32) {
    %c0_i32 = arith.constant 0 : i32
    %c0_i32_0 = arith.constant 0 : i32
    return %arg0, %c0_i32 : i32, i32
  }
}

</mosaic_0001>

<llo_original>
// kernel: tpu_custom_call.1
$region0: #{tpu_custom_call.1}
  #allocation0 [shape = 'u32[]', space=smem, size = 0x4, offset = 0x4, fixed_abs, tag = 'smem constant byte address 0x4 - core index']
  #allocation1 [shape = 'u32[72,128]{1,0:T(1,128)}', space=vmem, size = 0x9000, scoped, tag = 'internal scratch']
  #allocation2 [shape = 'f32[1,1]{1,0:T(1,128)S(6)}', space=smem, size = 0x200, scoped, tag = 'scoped memory for tpu_custom_call.1']
  %s0 = inlined_call_operand.hbm [shape: bf16[8,24], index: 0, kind: input, shape index: {}]
  %s1 = inlined_call_operand.hbm [shape: bf16[24,32], index: 1, kind: input, shape index: {}]
  %s2 = inlined_call_operand.vmem [shape: f32[1,32], index: 2, kind: input, shape index: {}]
  %s3 = inlined_call_operand.hbm [shape: bf16[32,32], index: 3, kind: input, shape index: {}]
  %s4 = inlined_call_operand.vmem [shape: f32[1,32], index: 4, kind: input, shape index: {}]
  %s5 = inlined_call_operand.vmem [shape: f32[1,32], index: 5, kind: input, shape index: {}]
  %s6 = inlined_call_operand.<no memory space> [shape: f32[1,1], index: 6, kind: input, shape index: {}]
  %s7 = inlined_call_operand.vmem [shape: f32[8,1], index: 7, kind: output, shape index: {}]
  %s8 = sld [smem:[#allocation0]]
  $region50: #{tpu_custom_call.1} parent=0
    _
  %s10 = ssub.s32 1, %s8
  %s11 = scalar_select 0, %s10, %s8
  %12 = sst [smem:[#allocation2]] %s6
  $region1: #{tpu_custom_call.1} parent=0
    #allocation3 [shape = 'u8[2048]{0}', space=vmem, size = 0x800, scoped, tag = 'input window, operand 0, single buffered']
    #allocation4 [shape = 's32[1]{0}', space=sflag, size = 0x4, scoped, tag = 'scoped memory for tpu_custom_call.1']
    #allocation5 [shape = 'u8[6144]{0}', space=vmem, size = 0x1800, scoped, tag = 'input window, operand 1, single buffered']
    #allocation6 [shape = 's32[1]{0}', space=sflag, size = 0x4, scoped, tag = 'scoped memory for tpu_custom_call.1']
    #allocation7 [shape = 'u8[8192]{0}', space=vmem, size = 0x2000, scoped, tag = 'input window, operand 3, single buffered']
    %13 = vsyncpa [#allocation4], 0
    %14 = vsyncpa [#allocation6], 0
    // Predicated region
    $region2: #{tpu_custom_call.1} parent=1 // pred_check
      _
    $region3: #{tpu_custom_call.1} parent=1 // pred_check_branch
      %16 = sbr.rel (0) target = $region5
    $region4: #{tpu_custom_call.1} parent=1 // pred_region
      %18 = vsyncadd [#allocation4], 0
      %s20 = sshll.u32 %s0, 4
      %s21 = int_to_ptr.hbm [resolvable:$true] %s20
      %s22 = sshll.u32 [#allocation3], 4
      %s23 = int_to_ptr.vmem [resolvable:$true] %s22
      %25 = dma.hbm_to_vmem [thread:$0]  %s21, 64, %s23, [#allocation4]
    $region5: #{tpu_custom_call.1} parent=1 // pred_fallthru
      _
    // Predicated region
    $region6: #{tpu_custom_call.1} parent=1 // pred_check
      _
    $region7: #{tpu_custom_call.1} parent=1 // pred_check_branch
      %27 = sbr.rel (0) target = $region9
    $region8: #{tpu_custom_call.1} parent=1 // pred_region
      %29 = vsyncadd [#allocation6], 0
      %s30 = sshll.u32 %s1, 4
      %s31 = int_to_ptr.hbm [resolvable:$true] %s30
      %s32 = sshll.u32 [#allocation5], 4
      %s33 = int_to_ptr.vmem [resolvable:$true] %s32
      %38 = dma.hbm_to_vmem [thread:$0]  %s31, 192, %s33, [#allocation6], 64, 64, 4
    $region9: #{tpu_custom_call.1} parent=1 // pred_fallthru
      _
    // Predicated region
    $region10: #{tpu_custom_call.1} parent=1 // pred_check
      _
    $region11: #{tpu_custom_call.1} parent=1 // pred_check_branch
      %40 = sbr.rel (0) target = $region13
    $region12: #{tpu_custom_call.1} parent=1 // pred_region
      _
    $region13: #{tpu_custom_call.1} parent=1 // pred_fallthru
      _
    // Predicated region
    $region14: #{tpu_custom_call.1} parent=1 // pred_check
      _
    $region15: #{tpu_custom_call.1} parent=1 // pred_check_branch
      %42 = sbr.rel (0) target = $region17
    $region16: #{tpu_custom_call.1} parent=1 // pred_region
      %44 = vsyncadd [#allocation6], 0
      %s45 = sshll.u32 %s3, 4
      %s46 = int_to_ptr.hbm [resolvable:$true] %s45
      %s47 = sshll.u32 [#allocation7], 4
      %s48 = int_to_ptr.vmem [resolvable:$true] %s47
      %53 = dma.hbm_to_vmem [thread:$0]  %s46, 256, %s48, [#allocation6], 64, 64, 4
    $region17: #{tpu_custom_call.1} parent=1 // pred_fallthru
      _
    // Predicated region
    $region18: #{tpu_custom_call.1} parent=1 // pred_check
      _
    $region19: #{tpu_custom_call.1} parent=1 // pred_check_branch
      %55 = sbr.rel (0) target = $region21
    $region20: #{tpu_custom_call.1} parent=1 // pred_region
      _
    $region21: #{tpu_custom_call.1} parent=1 // pred_fallthru
      _
    // Predicated region
    $region22: #{tpu_custom_call.1} parent=1 // pred_check
      _
    $region23: #{tpu_custom_call.1} parent=1 // pred_check_branch
      %57 = sbr.rel (0) target = $region25
    $region24: #{tpu_custom_call.1} parent=1 // pred_region
      _
    $region25: #{tpu_custom_call.1} parent=1 // pred_fallthru
      _
    // Predicated region
    $region26: #{tpu_custom_call.1} parent=1 // pred_check
      _
    $region27: #{tpu_custom_call.1} parent=1 // pred_check_branch
      %59 = sbr.rel (0) target = $region29
    $region28: #{tpu_custom_call.1} parent=1 // pred_region
      _
    $region29: #{tpu_custom_call.1} parent=1 // pred_fallthru
      _
    // Predicated region
    $region30: #{tpu_custom_call.1} parent=1 // pred_check
      _
    $region31: #{tpu_custom_call.1} parent=1 // pred_check_branch
      %61 = sbr.rel (0) target = $region33
    $region32: #{tpu_custom_call.1} parent=1 // pred_region
      %63 = dma.done [#allocation4], 64
    $region33: #{tpu_custom_call.1} parent=1 // pred_fallthru
      _
    // Predicated region
    $region34: #{tpu_custom_call.1} parent=1 // pred_check
      _
    $region35: #{tpu_custom_call.1} parent=1 // pred_check_branch
      %65 = sbr.rel (0) target = $region37
    $region36: #{tpu_custom_call.1} parent=1 // pred_region
      %67 = dma.done [#allocation6], 192
    $region37: #{tpu_custom_call.1} parent=1 // pred_fallthru
      _
    // Predicated region
    $region38: #{tpu_custom_call.1} parent=1 // pred_check
      _
    $region39: #{tpu_custom_call.1} parent=1 // pred_check_branch
      %69 = sbr.rel (0) target = $region41
    $region40: #{tpu_custom_call.1} parent=1 // pred_region
      %71 = dma.done [#allocation6], 256
    $region41: #{tpu_custom_call.1} parent=1 // pred_fallthru
      _
    %v73 = vld [vmem:[#allocation3] sm:$0xf]
    %v74 = vld [vmem:[#allocation5] sm:$0xf]
    %v75 = vld [vmem:[#allocation5 + $0x4] sm:$0xf]
    %v76 = vld [vmem:[#allocation5 + $0x8] sm:$0xf]
    %v77 = vld [vmem:[%s2] sm:$0x1]
    %v79 = vperm.slane %v77, 0
    %v84 = vunpack.c.l.b16 %v74
    %v85 = vunpack.c.l.b16 %v75
    %v86 = vunpack.c.l.b16 %v76
    %v87 = vpack.c.b16 %v85, %v84
    %v88 = vpack.c.b16 %v86, %v86
    %vm90 = vcmask 195584
    %v92 = vsel %vm90, %v73, 0
    %vm94 = vcmask 1043456
    %v96 = vsel %vm94, %v88, 0
    %98 = vmatpush.bf16.msra.mxu0 0
    %99 = vmatpush.bf16.msra.mxu0 0
    %100 = vmatpush.bf16.msra.mxu0 0
    %101 = vmatpush.bf16.msra.mxu0 0
    %102 = vmatpush.bf16.msra.mxu0 0
    %103 = vmatpush.bf16.msra.mxu0 0
    %104 = vmatpush.bf16.msra.mxu0 %v96
    %105 = vmatpush.bf16.msra.mxu0 %v87
    %106 = vmatmul.bf16.gmra.mxu0 %v92
    %v107 = vpop.f32.mrf.mxu0
    %v108 = vadd.f32 %v79, %v107
    %v109 = vpop.f32.mrf.mxu0
    %110 = vdwg.mxu0
    %v111 = vmax.f32 %v108, 0.0
    %v112 = vpack.c.bf16 %v111, %v111
    %v113 = vld [vmem:[#allocation7] sm:$0xf]
    %v114 = vld [vmem:[#allocation7 + $0x4] sm:$0xf]
    %v115 = vld [vmem:[#allocation7 + $0x8] sm:$0xf]
    %v116 = vld [vmem:[#allocation7 + $0xc] sm:$0xf]
    %v117 = vld [vmem:[%s4] sm:$0x1]
    %v119 = vperm.slane %v117, 0
    %v125 = vunpack.c.l.b16 %v113
    %v126 = vunpack.c.l.b16 %v114
    %v127 = vunpack.c.l.b16 %v115
    %v128 = vunpack.c.l.b16 %v116
    %v129 = vpack.c.b16 %v126, %v125
    %v130 = vpack.c.b16 %v128, %v127
    %vm133 = vcmask 261120
    %v135 = vsel %vm133, %v112, 0
    %137 = vmatpush.bf16.msra.mxu0 0
    %138 = vmatpush.bf16.msra.mxu0 0
    %139 = vmatpush.bf16.msra.mxu0 0
    %140 = vmatpush.bf16.msra.mxu0 0
    %141 = vmatpush.bf16.msra.mxu0 0
    %142 = vmatpush.bf16.msra.mxu0 0
    %143 = vmatpush.bf16.msra.mxu0 %v130
    %144 = vmatpush.bf16.msra.mxu0 %v129
    %145 = vmatmul.bf16.gmra.mxu0 %v135
    %v146 = vpop.f32.mrf.mxu0
    %v147 = vadd.f32 %v119, %v146
    %v148 = vpop.f32.mrf.mxu0
    %149 = vdwg.mxu0
    %v150 = vmax.f32 %v147, 0.0
    %v151 = vld [vmem:[%s5] sm:$0x1]
    %v153 = vperm.slane %v151, 0
    %v155 = vmul.f32 %v150, %v153
    %v156 = vsel %vm133, %v155, 0.0
    %157 = vadd.xlane.f32.xlu0 %v156
    %v158 = vpop.xlane.xlu0 %157
    %s159 = sld [smem:[#allocation2]]
    %v160 = vstv %s159
    %v161 = vadd.f32 %v158, %v160
    %vm162 = vcmask 7168
    %163 = vst.msk [vmem:[%s7] sm:$0xff] %vm162, %v161
    // Predicated region
    $region42: #{tpu_custom_call.1} parent=1 // pred_check
      _
    $region43: #{tpu_custom_call.1} parent=1 // pred_check_branch
      %165 = sbr.rel (0) target = $region45
    $region44: #{tpu_custom_call.1} parent=1 // pred_region
      _
    $region45: #{tpu_custom_call.1} parent=1 // pred_fallthru
      _
    // Predicated region
    $region46: #{tpu_custom_call.1} parent=1 // pred_check
      _
    $region47: #{tpu_custom_call.1} parent=1 // pred_check_branch
      %167 = sbr.rel (0) target = $region49
    $region48: #{tpu_custom_call.1} parent=1 // pred_region
      _
    $region49: #{tpu_custom_call.1} parent=1 // pred_fallthru
      _
    %168 = vsyncpa [#allocation4], 1
    %169 = vsyncpa [#allocation6], 1

</llo_original>
